<compile_context>
chip_gen: v7x
topology: tpu7x:2x2x1
jax: 0.10.0
libtpu: 0.0.40
codegen_flags: <defaults>
</compile_context>

<pallas_src>
import functools

import jax
import jax.numpy as jnp
from jax.experimental import pallas as pl
from jax.experimental.pallas import tpu as pltpu


# ---------------------------------------------------------------------------
# Kernels
# ---------------------------------------------------------------------------
def _se_kernel_hw_lanes(x_ref, w1_ref, w2_ref, o_ref, *, inv_hw):
    """x_ref/o_ref: (Bt, C, HW) with HW on the lane axis (HW % 128 == 0)."""
    x = x_ref[...]                                               # (Bt, C, HW)
    # Squeeze: lane-axis reduce, f32 accumulation fused into the sum (no
    # full-block f32 temp when x is bf16).
    y = jnp.sum(x, axis=-1, dtype=jnp.float32) * inv_hw          # (Bt, C)
    # Excitation: Linear -> ReLU -> Linear -> Sigmoid (no biases).
    h = jnp.maximum(
        jnp.dot(y, w1_ref[...], preferred_element_type=jnp.float32), 0.0)
    s = jax.nn.sigmoid(
        jnp.dot(h, w2_ref[...], preferred_element_type=jnp.float32))
    # Scale: gate computed / cast exactly once, broadcast over lanes.
    o_ref[...] = x * s.astype(x.dtype)[:, :, None]


def _se_kernel_c_lanes(x_ref, w1_ref, w2_ref, o_ref, *, inv_hw):
    """x_ref/o_ref: (Bt, HW, C) with C on the lane axis (HW not 128-aligned)."""
    x = x_ref[...]                                               # (Bt, HW, C)
    y = jnp.sum(x, axis=-2, dtype=jnp.float32) * inv_hw          # (Bt, C)
    h = jnp.maximum(
        jnp.dot(y, w1_ref[...], preferred_element_type=jnp.float32), 0.0)
    s = jax.nn.sigmoid(
        jnp.dot(h, w2_ref[...], preferred_element_type=jnp.float32))
    o_ref[...] = x * s.astype(x.dtype)[:, None, :]


# ---------------------------------------------------------------------------
# Chip-aware sizing helpers
# ---------------------------------------------------------------------------
def _num_tensorcores_per_chip():
    """TensorCores that a 'parallel' grid axis is sharded across (megacore)."""
    try:
        kind = jax.devices()[0].device_kind.lower()
    except Exception:
        return 1
    return 2 if any(t in kind for t in ("v4", "v5p", "v7", "7x")) else 1


def _vmem_limit_bytes():
    """Explicit scoped-VMEM limit: ~75% of physical VMEM, chip-aware."""
    cap = 128 << 20
    try:
        cap = int(getattr(pltpu.get_tpu_info(), "vmem_capacity_bytes", cap))
    except Exception:
        pass
    # 96 MiB on v5e/v6e (128 MiB physical), 48 MiB on v7x (64 MiB physical).
    return int(max(32 << 20, min(96 << 20, (cap * 3) // 4)))


def _pick_batch_tile(B, slab_bytes, slab_budget_bytes, num_tc):
    """Largest batch tile whose per-element slab stays under the budget."""
    bt = max(1, int(slab_budget_bytes // max(1, slab_bytes)))
    if num_tc >= 2 and B >= num_tc:
        # Only on multi-TC chips: keep >= num_tc grid steps so both
        # TensorCores stream HBM.  On single-TC v5e/v6e this would just halve
        # the DMA block for zero parallelism, so it is skipped there.
        bt = min(bt, B // num_tc)
    bt = max(1, min(bt, B))
    # Largest divisor of B that is <= bt (every block stays full-sized).
    # TODO(synk): grid=pl.cdiv(B, bt) + partial last block for prime B once
    # masked writeback of the padded rows is verified in interpret mode.
    while B % bt != 0:
        bt -= 1
    return bt


# ---------------------------------------------------------------------------
# Wrapper
# ---------------------------------------------------------------------------
def se_layer(x, w1, w2):
    """SELayer forward.  x: (B, C, H, W), w1: (C, C//r), w2: (C//r, C)."""
    B, C, H, W = x.shape
    HW = H * W
    Cr = w1.shape[1]

    num_tc = _num_tensorcores_per_chip()
    vmem_limit = _vmem_limit_bytes()
    weight_bytes = (C * Cr + Cr * C) * w1.dtype.itemsize
    # Per-step footprint ~= 2x input block + 2x output block (double
    # buffering) + resident weights + compiler temps => ~4x the slab.  Cap the
    # slab at 8 MiB: the ~0.35 us/step overhead is already amortized there.
    slab_budget = max(
        1 << 20, min(8 << 20, (vmem_limit - weight_bytes - (4 << 20)) // 4))

    slab_bytes = C * HW * x.dtype.itemsize
    Bt = _pick_batch_tile(B, slab_bytes, slab_budget, num_tc)
    inv_hw = 1.0 / float(HW)

    # Lane-dense layout selection: keep HW on lanes when it is 128-aligned;
    # otherwise put C on lanes (contiguous flatten / transpose is wrapper-side
    # layout plumbing done by XLA, not kernel compute).
    channels_on_lanes = (HW % 128 != 0)
    if channels_on_lanes:
        x_in = x.transpose(0, 2, 3, 1).reshape(B, HW, C)
        block = (Bt, HW, C)
        kernel = functools.partial(_se_kernel_c_lanes, inv_hw=inv_hw)
    else:
        x_in = x.reshape(B, C, HW)
        block = (Bt, C, HW)
        kernel = functools.partial(_se_kernel_hw_lanes, inv_hw=inv_hw)

    out_flat = pl.pallas_call(
        kernel,
        out_shape=jax.ShapeDtypeStruct(x_in.shape, x.dtype),
        grid_spec=pltpu.PrefetchScalarGridSpec(
            num_scalar_prefetch=0,
            grid=(B // Bt,),
            in_specs=[
                pl.BlockSpec(block, lambda b: (b, 0, 0)),
                pl.BlockSpec((C, Cr), lambda b: (0, 0)),   # VMEM-resident
                pl.BlockSpec((Cr, C), lambda b: (0, 0)),   # VMEM-resident
            ],
            out_specs=pl.BlockSpec(block, lambda b: (b, 0, 0)),
        ),
        compiler_params=pltpu.CompilerParams(
            dimension_semantics=("parallel",),
            vmem_limit_bytes=vmem_limit,
        ),
    )(x_in, w1, w2)

    if channels_on_lanes:
        return out_flat.reshape(B, H, W, C).transpose(0, 3, 1, 2)
    return out_flat.reshape(B, C, H, W)


# ---------------------------------------------------------------------------
# Pure-JAX reference (matches the PyTorch module semantics)
# ---------------------------------------------------------------------------
def reference_se(x, w1, w2):
    y = jnp.mean(x.astype(jnp.float32), axis=(2, 3))             # (B, C)
    h = jnp.maximum(y @ w1.astype(jnp.float32), 0.0)
    s = jax.nn.sigmoid(h @ w2.astype(jnp.float32))
    return x * s.astype(x.dtype)[:, :, None, None]


if __name__ == "__main__":
    def run_case(B, C, H, W, reduction, key):
        Cr = max(1, C // reduction)
        kx, k1, k2 = jax.random.split(key, 3)
        x = jax.random.normal(kx, (B, C, H, W), dtype=jnp.float32)
        # PyTorch Linear(channel, channel//r, bias=False).weight is (Cr, C);
        # we pass its transpose so the kernel computes y @ w1.
        w1 = (jax.random.uniform(k1, (Cr, C), dtype=jnp.float32,
                                 minval=-1.0, maxval=1.0) / jnp.sqrt(C)).T
        w2 = (jax.random.uniform(k2, (C, Cr), dtype=jnp.float32,
                                 minval=-1.0, maxval=1.0) / jnp.sqrt(Cr)).T
        out = jax.block_until_ready(se_layer(x, w1, w2))
        ref = reference_se(x, w1, w2)
        assert out.shape == (B, C, H, W)
        assert jnp.allclose(out, ref, atol=1e-5, rtol=1e-5), (
            f"mismatch vs reference at shape {(B, C, H, W)}")

    key = jax.random.PRNGKey(0)
    k_a, k_b = jax.random.split(key)
    # HW = 256 (multiple of 128)  -> HW-on-lanes kernel path.
    run_case(2, 64, 16, 16, 16, k_a)
    # HW = 49 (7x7 SE stage)      -> C-on-lanes kernel path, non-even batch.
    run_case(3, 64, 7, 7, 16, k_b)

    print("KERNEL_OK")
</pallas_src>

<mosaic_0001>
module attributes {stable_mosaic.version = 11 : i64} {
  func.func @_se_kernel_hw_lanes(%arg0: i32, %arg1: memref<2x64x256xf32, #tpu.memory_space<vmem>>, %arg2: memref<64x4xf32, #tpu.memory_space<vmem>>, %arg3: memref<4x64xf32, #tpu.memory_space<vmem>>, %arg4: memref<2x64x256xf32, #tpu.memory_space<vmem>>) attributes {dimension_semantics = [#tpu.dimension_semantics<parallel>], iteration_bounds = array<i64: 1>, scalar_prefetch = 0 : i64, scratch_operands = 0 : i64, tpu.core_type = #tpu.core_type<tc>, window_params = [{transform_indices = @transform_0, window_bounds = array<i64: 2, 64, 256>}, {pipeline_mode = #tpu.pipeline_mode<synchronous>, transform_indices = @transform_1, window_bounds = array<i64: 64, 4>}, {pipeline_mode = #tpu.pipeline_mode<synchronous>, transform_indices = @transform_2, window_bounds = array<i64: 4, 64>}, {transform_indices = @transform_3, window_bounds = array<i64: 2, 64, 256>}]} {
    %c0 = arith.constant 0 : index
    %c0_0 = arith.constant 0 : index
    %c0_1 = arith.constant 0 : index
    %0 = vector.load %arg1[%c0, %c0_0, %c0_1] : memref<2x64x256xf32, #tpu.memory_space<vmem>>, vector<2x64x256xf32>
    %cst = arith.constant dense<0.000000e+00> : vector<2x64xf32>
    %1 = vector.multi_reduction <add>, %0, %cst [2] : vector<2x64x256xf32> to vector<2x64xf32>
    %cst_2 = arith.constant 3.906250e-03 : f32
    %2 = vector.broadcast %cst_2 : f32 to vector<2x64xf32>
    %3 = arith.mulf %1, %2 : vector<2x64xf32>
    %c0_3 = arith.constant 0 : index
    %c0_4 = arith.constant 0 : index
    %4 = vector.load %arg2[%c0_3, %c0_4] : memref<64x4xf32, #tpu.memory_space<vmem>>, vector<64x4xf32>
    %cst_5 = arith.constant dense<0.000000e+00> : vector<2x4xf32>
    %5 = tpu.matmul %3, %4, %cst_5 {dimension_numbers = #tpu.dot_dimension_numbers<[1], [0], [0], [1], [0, 0, 1, 1], [], []>} : vector<2x64xf32>, vector<64x4xf32>, vector<2x4xf32> -> vector<2x4xf32>
    %cst_6 = arith.constant 0.000000e+00 : f32
    %6 = vector.broadcast %cst_6 : f32 to vector<2x4xf32>
    %7 = arith.maximumf %5, %6 : vector<2x4xf32>
    %c0_7 = arith.constant 0 : index
    %c0_8 = arith.constant 0 : index
    %8 = vector.load %arg3[%c0_7, %c0_8] : memref<4x64xf32, #tpu.memory_space<vmem>>, vector<4x64xf32>
    %cst_9 = arith.constant dense<0.000000e+00> : vector<2x64xf32>
    %9 = tpu.matmul %7, %8, %cst_9 {dimension_numbers = #tpu.dot_dimension_numbers<[1], [0], [0], [1], [0, 0, 1, 1], [], []>} : vector<2x4xf32>, vector<4x64xf32>, vector<2x64xf32> -> vector<2x64xf32>
    %10 = arith.negf %9 : vector<2x64xf32>
    %11 = math.exp %10 : vector<2x64xf32>
    %cst_10 = arith.constant 1.000000e+00 : f32
    %12 = vector.broadcast %cst_10 : f32 to vector<2x64xf32>
    %13 = arith.addf %12, %11 : vector<2x64xf32>
    %14 = arith.divf %12, %13 : vector<2x64xf32>
    %15 = vector.shape_cast %14 : vector<2x64xf32> to vector<2x64x1xf32>
    %16 = vector.broadcast %15 : vector<2x64x1xf32> to vector<2x64x256xf32>
    %17 = arith.mulf %0, %16 : vector<2x64x256xf32>
    %c0_11 = arith.constant 0 : index
    %c0_12 = arith.constant 0 : index
    %c0_13 = arith.constant 0 : index
    %18 = vector.load %arg4[%c0_11, %c0_12, %c0_13] : memref<2x64x256xf32, #tpu.memory_space<vmem>>, vector<2x64x256xf32>
    tpu.vector_store %arg4[%c0_11, %c0_12, %c0_13], %17 {strides = array<i32>} : memref<2x64x256xf32, #tpu.memory_space<vmem>>, vector<2x64x256xf32>,
    return
  }
  func.func @transform_0(%arg0: i32) -> (i32, i32, i32) {
    %c0_i32 = arith.constant 0 : i32
    %c0_i32_0 = arith.constant 0 : i32
    %c0_i32_1 = arith.constant 0 : i32
    return %arg0, %c0_i32, %c0_i32_0 : i32, i32, i32
  }
  func.func @transform_1(%arg0: i32) -> (i32, i32) {
    %c0_i32 = arith.constant 0 : i32
    %c0_i32_0 = arith.constant 0 : i32
    %c0_i32_1 = arith.constant 0 : i32
    return %c0_i32, %c0_i32_0 : i32, i32
  }
  func.func @transform_2(%arg0: i32) -> (i32, i32) {
    %c0_i32 = arith.constant 0 : i32
    %c0_i32_0 = arith.constant 0 : i32
    %c0_i32_1 = arith.constant 0 : i32
    return %c0_i32, %c0_i32_0 : i32, i32
  }
  func.func @transform_3(%arg0: i32) -> (i32, i32, i32) {
    %c0_i32 = arith.constant 0 : i32
    %c0_i32_0 = arith.constant 0 : i32
    %c0_i32_1 = arith.constant 0 : i32
    return %arg0, %c0_i32, %c0_i32_0 : i32, i32, i32
  }
}

</mosaic_0001>

<llo_original>
// kernel: tpu_custom_call.1
$region0: #{tpu_custom_call.1}
  #allocation0 [shape = 'u32[]', space=smem, size = 0x4, offset = 0x4, fixed_abs, tag = 'smem constant byte address 0x4 - core index']
  #allocation1 [shape = 'u32[144,128]{1,0:T(1,128)}', space=vmem, size = 0x12000, scoped, tag = 'internal scratch']
  %s0 = inlined_call_operand.hbm [shape: f32[2,64,256], index: 0, kind: input, shape index: {}]
  %s1 = inlined_call_operand.hbm [shape: f32[64,4], index: 1, kind: input, shape index: {}]
  %s2 = inlined_call_operand.hbm [shape: f32[4,64], index: 2, kind: input, shape index: {}]
  %s3 = inlined_call_operand.hbm [shape: f32[2,64,256], index: 3, kind: output, shape index: {}]
  %s4 = sld [smem:[#allocation0]]
  $region34: #{tpu_custom_call.1} parent=0
    _
  %s6 = ssub.s32 1, %s4
  %s7 = scalar_select 0, %s6, %s4
  $region1: #{tpu_custom_call.1} parent=0
    #allocation2 [shape = 'u8[131072]{0}', space=vmem, size = 0x20000, scoped, tag = 'input window, operand 0, single buffered']
    #allocation3 [shape = 's32[1]{0}', space=sflag, size = 0x4, scoped, tag = 'scoped memory for tpu_custom_call.1']
    #allocation4 [shape = 's32[1]{0}', space=sflag, size = 0x4, scoped, tag = 'scoped memory for tpu_custom_call.1']
    #allocation5 [shape = 'u8[32768]{0}', space=vmem, size = 0x8000, scoped, tag = 'input window, operand 1, single buffered']
    #allocation6 [shape = 's32[1]{0}', space=sflag, size = 0x4, scoped, tag = 'scoped memory for tpu_custom_call.1']
    #allocation7 [shape = 'u8[2048]{0}', space=vmem, size = 0x800, scoped, tag = 'input window, operand 2, single buffered']
    #allocation8 [shape = 'u8[131072]{0}', space=vmem, size = 0x20000, scoped, tag = 'output window, operand 0, single buffered']
    %8 = vsyncpa [#allocation3], 0
    %9 = vsyncpa [#allocation6], 0
    %10 = vsyncpa [#allocation4], 0
    // Predicated region
    $region2: #{tpu_custom_call.1} parent=1 // pred_check
      _
    $region3: #{tpu_custom_call.1} parent=1 // pred_check_branch
      %12 = sbr.rel (0) target = $region5
    $region4: #{tpu_custom_call.1} parent=1 // pred_region
      %s14 = ssub.s32 4096, 4096
      %15 = vsyncadd [#allocation3], %s14
      %s16 = sshll.u32 [#allocation2], 4
      %s17 = int_to_ptr.vmem [resolvable:$true] %s16
      %22 = dma.hbm_to_vmem [thread:$0]  %s0, 4096, %s17, [#allocation3], 256, 256, 16
    $region5: #{tpu_custom_call.1} parent=1 // pred_fallthru
      _
    // Predicated region
    $region6: #{tpu_custom_call.1} parent=1 // pred_check
      _
    $region7: #{tpu_custom_call.1} parent=1 // pred_check_branch
      %24 = sbr.rel (0) target = $region9
    $region8: #{tpu_custom_call.1} parent=1 // pred_region
      %s26 = ssub.s32 1024, 1024
      %27 = vsyncadd [#allocation6], %s26
      %s28 = sshll.u32 [#allocation5], 4
      %s29 = int_to_ptr.vmem [resolvable:$true] %s28
      %34 = dma.hbm_to_vmem [thread:$0]  %s1, 1024, %s29, [#allocation6], 128, 128, 8
    $region9: #{tpu_custom_call.1} parent=1 // pred_fallthru
      _
    // Predicated region
    $region10: #{tpu_custom_call.1} parent=1 // pred_check
      _
    $region11: #{tpu_custom_call.1} parent=1 // pred_check_branch
      %36 = sbr.rel (0) target = $region13
    $region12: #{tpu_custom_call.1} parent=1 // pred_region
      %s38 = ssub.s32 64, 64
      %39 = vsyncadd [#allocation6], %s38
      %s41 = sshll.u32 [#allocation7], 4
      %s42 = int_to_ptr.vmem [resolvable:$true] %s41
      %44 = dma.hbm_to_vmem [thread:$0]  %s2, 64, %s42, [#allocation6]
    $region13: #{tpu_custom_call.1} parent=1 // pred_fallthru
      _
    // Predicated region
    $region14: #{tpu_custom_call.1} parent=1 // pred_check
      _
    $region15: #{tpu_custom_call.1} parent=1 // pred_check_branch
      %46 = sbr.rel (0) target = $region17
    $region16: #{tpu_custom_call.1} parent=1 // pred_region
      %47 = dma.done [#allocation3], 4096
    $region17: #{tpu_custom_call.1} parent=1 // pred_fallthru
      _
    // Predicated region
    $region18: #{tpu_custom_call.1} parent=1 // pred_check
      _
    $region19: #{tpu_custom_call.1} parent=1 // pred_check_branch
      %49 = sbr.rel (0) target = $region21
    $region20: #{tpu_custom_call.1} parent=1 // pred_region
      %50 = dma.done [#allocation6], 1024
    $region21: #{tpu_custom_call.1} parent=1 // pred_fallthru
      _
    // Predicated region
    $region22: #{tpu_custom_call.1} parent=1 // pred_check
      _
    $region23: #{tpu_custom_call.1} parent=1 // pred_check_branch
      %52 = sbr.rel (0) target = $region25
    $region24: #{tpu_custom_call.1} parent=1 // pred_region
      %53 = dma.done [#allocation6], 64
    $region25: #{tpu_custom_call.1} parent=1 // pred_fallthru
      _
    %v54 = vld [vmem:[#allocation2] sm:$0xff]
    %v55 = vld [vmem:[#allocation2 + $0x8] sm:$0xff]
    %v56 = vld [vmem:[#allocation2 + $0x10] sm:$0xff]
    %v57 = vld [vmem:[#allocation2 + $0x18] sm:$0xff]
    %v58 = vld [vmem:[#allocation2 + $0x20] sm:$0xff]
    %v59 = vld [vmem:[#allocation2 + $0x28] sm:$0xff]
    %v60 = vld [vmem:[#allocation2 + $0x30] sm:$0xff]
    %v61 = vld [vmem:[#allocation2 + $0x38] sm:$0xff]
    %v62 = vld [vmem:[#allocation2 + $0x40] sm:$0xff]
    %v63 = vld [vmem:[#allocation2 + $0x48] sm:$0xff]
    %v64 = vld [vmem:[#allocation2 + $0x50] sm:$0xff]
    %v65 = vld [vmem:[#allocation2 + $0x58] sm:$0xff]
    %v66 = vld [vmem:[#allocation2 + $0x60] sm:$0xff]
    %v67 = vld [vmem:[#allocation2 + $0x68] sm:$0xff]
    %v68 = vld [vmem:[#allocation2 + $0x70] sm:$0xff]
    %v69 = vld [vmem:[#allocation2 + $0x78] sm:$0xff]
    %v70 = vld [vmem:[#allocation2 + $0x80] sm:$0xff]
    %v71 = vld [vmem:[#allocation2 + $0x88] sm:$0xff]
    %v72 = vld [vmem:[#allocation2 + $0x90] sm:$0xff]
    %v73 = vld [vmem:[#allocation2 + $0x98] sm:$0xff]
    %v74 = vld [vmem:[#allocation2 + $0xa0] sm:$0xff]
    %v75 = vld [vmem:[#allocation2 + $0xa8] sm:$0xff]
    %v76 = vld [vmem:[#allocation2 + $0xb0] sm:$0xff]
    %v77 = vld [vmem:[#allocation2 + $0xb8] sm:$0xff]
    %v78 = vld [vmem:[#allocation2 + $0xc0] sm:$0xff]
    %v79 = vld [vmem:[#allocation2 + $0xc8] sm:$0xff]
    %v80 = vld [vmem:[#allocation2 + $0xd0] sm:$0xff]
    %v81 = vld [vmem:[#allocation2 + $0xd8] sm:$0xff]
    %v82 = vld [vmem:[#allocation2 + $0xe0] sm:$0xff]
    %v83 = vld [vmem:[#allocation2 + $0xe8] sm:$0xff]
    %v84 = vld [vmem:[#allocation2 + $0xf0] sm:$0xff]
    %v85 = vld [vmem:[#allocation2 + $0xf8] sm:$0xff]
    %v86 = vadd.f32 %v54, %v55
    %87 = vadd.xlane.f32.xlu0 %v86
    %v88 = vpop.xlane.xlu0 %87
    %v89 = vadd.f32 %v56, %v57
    %90 = vadd.xlane.f32.xlu0 %v89
    %v91 = vpop.xlane.xlu0 %90
    %v92 = vadd.f32 %v58, %v59
    %93 = vadd.xlane.f32.xlu0 %v92
    %v94 = vpop.xlane.xlu0 %93
    %v95 = vadd.f32 %v60, %v61
    %96 = vadd.xlane.f32.xlu0 %v95
    %v97 = vpop.xlane.xlu0 %96
    %v98 = vadd.f32 %v62, %v63
    %99 = vadd.xlane.f32.xlu0 %v98
    %v100 = vpop.xlane.xlu0 %99
    %v101 = vadd.f32 %v64, %v65
    %102 = vadd.xlane.f32.xlu0 %v101
    %v103 = vpop.xlane.xlu0 %102
    %v104 = vadd.f32 %v66, %v67
    %105 = vadd.xlane.f32.xlu0 %v104
    %v106 = vpop.xlane.xlu0 %105
    %v107 = vadd.f32 %v68, %v69
    %108 = vadd.xlane.f32.xlu0 %v107
    %v109 = vpop.xlane.xlu0 %108
    %v110 = vadd.f32 %v70, %v71
    %111 = vadd.xlane.f32.xlu0 %v110
    %v112 = vpop.xlane.xlu0 %111
    %v113 = vadd.f32 %v72, %v73
    %114 = vadd.xlane.f32.xlu0 %v113
    %v115 = vpop.xlane.xlu0 %114
    %v116 = vadd.f32 %v74, %v75
    %117 = vadd.xlane.f32.xlu0 %v116
    %v118 = vpop.xlane.xlu0 %117
    %v119 = vadd.f32 %v76, %v77
    %120 = vadd.xlane.f32.xlu0 %v119
    %v121 = vpop.xlane.xlu0 %120
    %v122 = vadd.f32 %v78, %v79
    %123 = vadd.xlane.f32.xlu0 %v122
    %v124 = vpop.xlane.xlu0 %123
    %v125 = vadd.f32 %v80, %v81
    %126 = vadd.xlane.f32.xlu0 %v125
    %v127 = vpop.xlane.xlu0 %126
    %v128 = vadd.f32 %v82, %v83
    %129 = vadd.xlane.f32.xlu0 %v128
    %v130 = vpop.xlane.xlu0 %129
    %v131 = vadd.f32 %v84, %v85
    %132 = vadd.xlane.f32.xlu0 %v131
    %v133 = vpop.xlane.xlu0 %132
    %v134 = vmul.f32 %v88, 0.00390625
    %v135 = vmul.f32 %v91, 0.00390625
    %v136 = vmul.f32 %v94, 0.00390625
    %v137 = vmul.f32 %v97, 0.00390625
    %v138 = vmul.f32 %v100, 0.00390625
    %v139 = vmul.f32 %v103, 0.00390625
    %v140 = vmul.f32 %v106, 0.00390625
    %v141 = vmul.f32 %v109, 0.00390625
    %v142 = vmul.f32 %v112, 0.00390625
    %v143 = vmul.f32 %v115, 0.00390625
    %v144 = vmul.f32 %v118, 0.00390625
    %v145 = vmul.f32 %v121, 0.00390625
    %v146 = vmul.f32 %v124, 0.00390625
    %v147 = vmul.f32 %v127, 0.00390625
    %v148 = vmul.f32 %v130, 0.00390625
    %v149 = vmul.f32 %v133, 0.00390625
    %v150 = vld [vmem:[#allocation5] sm:$0xff]
    %v151 = vld [vmem:[#allocation5 + $0x8] sm:$0xff]
    %v152 = vld [vmem:[#allocation5 + $0x10] sm:$0xff]
    %v153 = vld [vmem:[#allocation5 + $0x18] sm:$0xff]
    %v154 = vld [vmem:[#allocation5 + $0x20] sm:$0xff]
    %v155 = vld [vmem:[#allocation5 + $0x28] sm:$0xff]
    %v156 = vld [vmem:[#allocation5 + $0x30] sm:$0xff]
    %v157 = vld [vmem:[#allocation5 + $0x38] sm:$0xff]
    %v174 = vlaneseq
    %v175 = vand.u32 %v174, 127
    %v176 = vlaneseq
    %v177 = vshrl.u32 %v176, 7
    %v178 = vsub.s32 %v175, %v177
    %v179 = vrot.slane %v134, %v178
    %v180 = vadd.s32 %v175, 4294967288
    %v181 = vlaneseq
    %v182 = vshrl.u32 %v181, 7
    %v183 = vsub.s32 %v180, %v182
    %v184 = vrot.slane %v135, %v183
    %vm185 = vcmask 130112
    %v186 = vsel %vm185, %v184, %v179
    %v187 = vadd.s32 %v175, 4294967280
    %v188 = vlaneseq
    %v189 = vshrl.u32 %v188, 7
    %v190 = vsub.s32 %v187, %v189
    %v191 = vrot.slane %v136, %v190
    %vm192 = vcmask 195712
    %v193 = vsel %vm192, %v191, %v186
    %v194 = vadd.s32 %v175, 4294967272
    %v195 = vlaneseq
    %v196 = vshrl.u32 %v195, 7
    %v197 = vsub.s32 %v194, %v196
    %v198 = vrot.slane %v137, %v197
    %vm199 = vcmask 261312
    %v200 = vsel %vm199, %v198, %v193
    %v201 = vadd.s32 %v175, 4294967264
    %v202 = vlaneseq
    %v203 = vshrl.u32 %v202, 7
    %v204 = vsub.s32 %v201, %v203
    %v205 = vrot.slane %v138, %v204
    %vm206 = vcmask 326912
    %v207 = vsel %vm206, %v205, %v200
    %v208 = vadd.s32 %v175, 4294967256
    %v209 = vlaneseq
    %v210 = vshrl.u32 %v209, 7
    %v211 = vsub.s32 %v208, %v210
    %v212 = vrot.slane %v139, %v211
    %vm213 = vcmask 392512
    %v214 = vsel %vm213, %v212, %v207
    %v215 = vadd.s32 %v175, 4294967248
    %v216 = vlaneseq
    %v217 = vshrl.u32 %v216, 7
    %v218 = vsub.s32 %v215, %v217
    %v219 = vrot.slane %v140, %v218
    %vm220 = vcmask 458112
    %v221 = vsel %vm220, %v219, %v214
    %v222 = vadd.s32 %v175, 4294967240
    %v223 = vlaneseq
    %v224 = vshrl.u32 %v223, 7
    %v225 = vsub.s32 %v222, %v224
    %v226 = vrot.slane %v141, %v225
    %vm227 = vcmask 523712
    %v228 = vsel %vm227, %v226, %v221
    %v229 = vlaneseq
    %v230 = vshrl.u32 %v229, 7
    %v231 = vsub.s32 %v175, %v230
    %v232 = vrot.slane %v142, %v231
    %v233 = vlaneseq
    %v234 = vshrl.u32 %v233, 7
    %v235 = vsub.s32 %v180, %v234
    %v236 = vrot.slane %v143, %v235
    %v237 = vsel %vm185, %v236, %v232
    %v238 = vlaneseq
    %v239 = vshrl.u32 %v238, 7
    %v240 = vsub.s32 %v187, %v239
    %v241 = vrot.slane %v144, %v240
    %v242 = vsel %vm192, %v241, %v237
    %v243 = vlaneseq
    %v244 = vshrl.u32 %v243, 7
    %v245 = vsub.s32 %v194, %v244
    %v246 = vrot.slane %v145, %v245
    %v247 = vsel %vm199, %v246, %v242
    %v248 = vlaneseq
    %v249 = vshrl.u32 %v248, 7
    %v250 = vsub.s32 %v201, %v249
    %v251 = vrot.slane %v146, %v250
    %v252 = vsel %vm206, %v251, %v247
    %v253 = vlaneseq
    %v254 = vshrl.u32 %v253, 7
    %v255 = vsub.s32 %v208, %v254
    %v256 = vrot.slane %v147, %v255
    %v257 = vsel %vm213, %v256, %v252
    %v258 = vlaneseq
    %v259 = vshrl.u32 %v258, 7
    %v260 = vsub.s32 %v215, %v259
    %v261 = vrot.slane %v148, %v260
    %v262 = vsel %vm220, %v261, %v257
    %v263 = vlaneseq
    %v264 = vshrl.u32 %v263, 7
    %v265 = vsub.s32 %v222, %v264
    %v266 = vrot.slane %v149, %v265
    %v267 = vsel %vm227, %v266, %v262
    %vm268 = vcmask 1041409
    %v269 = vsel %vm268, %v267, %v228
    %vm270 = vcmask 523264
    %v271 = vsel %vm270, %v269, 0
    %273 = vmatprep.subr.mxu0 0.0
    %274 = vmatpush1.msra.mxu0 %v150
    %275 = vmatprep.subr.mxu0 0.0
    %276 = vmatpush1.msra.mxu0 %v151
    %277 = vmatprep.subr.mxu0 0.0
    %278 = vmatpush1.msra.mxu0 %v152
    %279 = vmatprep.subr.mxu0 0.0
    %280 = vmatpush1.msra.mxu0 %v153
    %281 = vmatprep.subr.mxu0 0.0
    %282 = vmatpush1.msra.mxu0 %v154
    %283 = vmatprep.subr.mxu0 0.0
    %284 = vmatpush1.msra.mxu0 %v155
    %285 = vmatprep.subr.mxu0 0.0
    %286 = vmatpush1.msra.mxu0 %v156
    %287 = vmatprep.subr.mxu0 0.0
    %288 = vmatpush1.msra.mxu0 %v157
    %289 = vmatprep.subr.mxu0 0.0
    %290 = vmatpush1.msra.mxu0 0.0
    %291 = vmatprep.subr.mxu0 0.0
    %292 = vmatpush1.msra.mxu0 0.0
    %293 = vmatprep.subr.mxu0 0.0
    %294 = vmatpush1.msra.mxu0 0.0
    %295 = vmatprep.subr.mxu0 0.0
    %296 = vmatpush1.msra.mxu0 0.0
    %297 = vmatprep.subr.mxu0 0.0
    %298 = vmatpush1.msra.mxu0 0.0
    %299 = vmatprep.subr.mxu0 0.0
    %300 = vmatpush1.msra.mxu0 0.0
    %301 = vmatprep.subr.mxu0 0.0
    %302 = vmatpush1.msra.mxu0 0.0
    %303 = vmatprep.subr.mxu0 0.0
    %304 = vmatpush1.msra.mxu0 0.0
    %305 = vmatprep.subr.mxu0 0.0
    %306 = vmatpush1.msra.mxu0 0.0
    %307 = vmatprep.subr.mxu0 0.0
    %308 = vmatpush1.msra.mxu0 0.0
    %309 = vmatprep.subr.mxu0 0.0
    %310 = vmatpush1.msra.mxu0 0.0
    %311 = vmatprep.subr.mxu0 0.0
    %312 = vmatpush1.msra.mxu0 0.0
    %313 = vmatprep.subr.mxu0 0.0
    %314 = vmatpush1.msra.mxu0 0.0
    %315 = vmatprep.subr.mxu0 0.0
    %316 = vmatpush1.msra.mxu0 0.0
    %317 = vmatprep.subr.mxu0 0.0
    %318 = vmatpush1.msra.mxu0 0.0
    %319 = vmatprep.subr.mxu0 0.0
    %320 = vmatpush1.msra.mxu0 0.0
    %321 = vmatprep.subr.mxu0 0.0
    %322 = vmatpush1.msra.mxu0 0.0
    %323 = vmatprep.subr.mxu0 0.0
    %324 = vmatpush1.msra.mxu0 0.0
    %325 = vmatprep.subr.mxu0 0.0
    %326 = vmatpush1.msra.mxu0 0.0
    %327 = vmatprep.subr.mxu0 0.0
    %328 = vmatpush1.msra.mxu0 0.0
    %329 = vmatprep.subr.mxu0 0.0
    %330 = vmatpush1.msra.mxu0 0.0
    %331 = vmatprep.subr.mxu0 0.0
    %332 = vmatpush1.msra.mxu0 0.0
    %333 = vmatprep.subr.mxu0 0.0
    %334 = vmatpush1.msra.mxu0 0.0
    %335 = vmatprep.subr.mxu0 0.0
    %336 = vmatpush1.msra.mxu0 0.0
    %337 = vmatprep.mubr.f32.mxu0 0.0
    %338 = vmatmul.mubr.f32.gmra.mrb[0].mxu0 %v271
    %v339 = vpop.f32.mrb[0].mxu0
    %v340 = vadd.f32 0.0, %v339
    %v341 = vpop.f32.mrb[0].mxu0
    %342 = vdwg.mxu0
    %v343 = vmax.f32 %v340, 0.0
    %v344 = vld [vmem:[#allocation7] sm:$0xf]
    %vm345 = vcmask 31744
    %v347 = vsel %vm345, %v343, 0
    %vm349 = vcmask 1043456
    %v351 = vsel %vm349, %v344, 0
    %353 = vmatprep.subr.mxu0 0.0
    %354 = vmatpush1.msra.mxu0 %v351
    %355 = vmatprep.subr.mxu0 0.0
    %356 = vmatpush1.msra.mxu0 0.0
    %357 = vmatprep.subr.mxu0 0.0
    %358 = vmatpush1.msra.mxu0 0.0
    %359 = vmatprep.subr.mxu0 0.0
    %360 = vmatpush1.msra.mxu0 0.0
    %361 = vmatprep.subr.mxu0 0.0
    %362 = vmatpush1.msra.mxu0 0.0
    %363 = vmatprep.subr.mxu0 0.0
    %364 = vmatpush1.msra.mxu0 0.0
    %365 = vmatprep.subr.mxu0 0.0
    %366 = vmatpush1.msra.mxu0 0.0
    %367 = vmatprep.subr.mxu0 0.0
    %368 = vmatpush1.msra.mxu0 0.0
    %369 = vmatprep.subr.mxu0 0.0
    %370 = vmatpush1.msra.mxu0 0.0
    %371 = vmatprep.subr.mxu0 0.0
    %372 = vmatpush1.msra.mxu0 0.0
    %373 = vmatprep.subr.mxu0 0.0
    %374 = vmatpush1.msra.mxu0 0.0
    %375 = vmatprep.subr.mxu0 0.0
    %376 = vmatpush1.msra.mxu0 0.0
    %377 = vmatprep.subr.mxu0 0.0
    %378 = vmatpush1.msra.mxu0 0.0
    %379 = vmatprep.subr.mxu0 0.0
    %380 = vmatpush1.msra.mxu0 0.0
    %381 = vmatprep.subr.mxu0 0.0
    %382 = vmatpush1.msra.mxu0 0.0
    %383 = vmatprep.subr.mxu0 0.0
    %384 = vmatpush1.msra.mxu0 0.0
    %385 = vmatprep.subr.mxu0 0.0
    %386 = vmatpush1.msra.mxu0 0.0
    %387 = vmatprep.subr.mxu0 0.0
    %388 = vmatpush1.msra.mxu0 0.0
    %389 = vmatprep.subr.mxu0 0.0
    %390 = vmatpush1.msra.mxu0 0.0
    %391 = vmatprep.subr.mxu0 0.0
    %392 = vmatpush1.msra.mxu0 0.0
    %393 = vmatprep.subr.mxu0 0.0
    %394 = vmatpush1.msra.mxu0 0.0
    %395 = vmatprep.subr.mxu0 0.0
    %396 = vmatpush1.msra.mxu0 0.0
    %397 = vmatprep.subr.mxu0 0.0
    %398 = vmatpush1.msra.mxu0 0.0
    %399 = vmatprep.subr.mxu0 0.0
    %400 = vmatpush1.msra.mxu0 0.0
    %401 = vmatprep.subr.mxu0 0.0
    %402 = vmatpush1.msra.mxu0 0.0
    %403 = vmatprep.subr.mxu0 0.0
    %404 = vmatpush1.msra.mxu0 0.0
    %405 = vmatprep.subr.mxu0 0.0
    %406 = vmatpush1.msra.mxu0 0.0
    %407 = vmatprep.subr.mxu0 0.0
    %408 = vmatpush1.msra.mxu0 0.0
    %409 = vmatprep.subr.mxu0 0.0
    %410 = vmatpush1.msra.mxu0 0.0
    %411 = vmatprep.subr.mxu0 0.0
    %412 = vmatpush1.msra.mxu0 0.0
    %413 = vmatprep.subr.mxu0 0.0
    %414 = vmatpush1.msra.mxu0 0.0
    %415 = vmatprep.subr.mxu0 0.0
    %416 = vmatpush1.msra.mxu0 0.0
    %417 = vmatprep.mubr.f32.mxu0 0.0
    %418 = vmatmul.mubr.f32.gmra.mrb[0].mxu0 %v347
    %v419 = vpop.f32.mrb[0].mxu0
    %v420 = vadd.f32 0.0, %v419
    %v421 = vpop.f32.mrb[0].mxu0
    %422 = vdwg.mxu0
    %v423 = vxor.u32 %v420, 2147483648
    %v424 = vmul.f32 %v423, 1.442695
    %v425 = vpow.pop %v424
    %v426 = vadd.f32 %v425, 1.0
    %v427 = vrcp.pop %v426
    %v428 = vmul.f32 1.0, %v427
    %v429 = vlaneseq
    %v430 = vshrl.u32 %v429, 7
    %v431 = vsub.s32 0, %v430
    %v432 = vrot.slane %v428, %v431
    %434 = vbcast.lane.b32.xlu0 %v432, 256
    %v435 = vpop.permute.xlu0 %434
    %s437 = sor.u32 256, 8
    %438 = vbcast.lane.b32.xlu0 %v432, %s437
    %v439 = vpop.permute.xlu0 %438
    %s441 = sor.u32 256, 16
    %442 = vbcast.lane.b32.xlu0 %v432, %s441
    %v443 = vpop.permute.xlu0 %442
    %s445 = sor.u32 256, 24
    %446 = vbcast.lane.b32.xlu0 %v432, %s445
    %v447 = vpop.permute.xlu0 %446
    %s449 = sor.u32 256, 32
    %450 = vbcast.lane.b32.xlu0 %v432, %s449
    %v451 = vpop.permute.xlu0 %450
    %s453 = sor.u32 256, 40
    %454 = vbcast.lane.b32.xlu0 %v432, %s453
    %v455 = vpop.permute.xlu0 %454
    %s457 = sor.u32 256, 48
    %458 = vbcast.lane.b32.xlu0 %v432, %s457
    %v459 = vpop.permute.xlu0 %458
    %s461 = sor.u32 256, 56
    %462 = vbcast.lane.b32.xlu0 %v432, %s461
    %v463 = vpop.permute.xlu0 %462
    %v464 = vlaneseq
    %v465 = vshrl.u32 %v464, 7
    %v466 = vsub.s32 1, %v465
    %v467 = vrot.slane %v428, %v466
    %469 = vbcast.lane.b32.xlu0 %v467, 256
    %v470 = vpop.permute.xlu0 %469
    %s472 = sor.u32 256, 8
    %473 = vbcast.lane.b32.xlu0 %v467, %s472
    %v474 = vpop.permute.xlu0 %473
    %s476 = sor.u32 256, 16
    %477 = vbcast.lane.b32.xlu0 %v467, %s476
    %v478 = vpop.permute.xlu0 %477
    %s480 = sor.u32 256, 24
    %481 = vbcast.lane.b32.xlu0 %v467, %s480
    %v482 = vpop.permute.xlu0 %481
    %s484 = sor.u32 256, 32
    %485 = vbcast.lane.b32.xlu0 %v467, %s484
    %v486 = vpop.permute.xlu0 %485
    %s488 = sor.u32 256, 40
    %489 = vbcast.lane.b32.xlu0 %v467, %s488
    %v490 = vpop.permute.xlu0 %489
    %s492 = sor.u32 256, 48
    %493 = vbcast.lane.b32.xlu0 %v467, %s492
    %v494 = vpop.permute.xlu0 %493
    %s496 = sor.u32 256, 56
    %497 = vbcast.lane.b32.xlu0 %v467, %s496
    %v498 = vpop.permute.xlu0 %497
    %v499 = vmul.f32 %v54, %v435
    %v500 = vmul.f32 %v55, %v435
    %v501 = vmul.f32 %v56, %v439
    %v502 = vmul.f32 %v57, %v439
    %v503 = vmul.f32 %v58, %v443
    %v504 = vmul.f32 %v59, %v443
    %v505 = vmul.f32 %v60, %v447
    %v506 = vmul.f32 %v61, %v447
    %v507 = vmul.f32 %v62, %v451
    %v508 = vmul.f32 %v63, %v451
    %v509 = vmul.f32 %v64, %v455
    %v510 = vmul.f32 %v65, %v455
    %v511 = vmul.f32 %v66, %v459
    %v512 = vmul.f32 %v67, %v459
    %v513 = vmul.f32 %v68, %v463
    %v514 = vmul.f32 %v69, %v463
    %v515 = vmul.f32 %v70, %v470
    %v516 = vmul.f32 %v71, %v470
    %v517 = vmul.f32 %v72, %v474
    %v518 = vmul.f32 %v73, %v474
    %v519 = vmul.f32 %v74, %v478
    %v520 = vmul.f32 %v75, %v478
    %v521 = vmul.f32 %v76, %v482
    %v522 = vmul.f32 %v77, %v482
    %v523 = vmul.f32 %v78, %v486
    %v524 = vmul.f32 %v79, %v486
    %v525 = vmul.f32 %v80, %v490
    %v526 = vmul.f32 %v81, %v490
    %v527 = vmul.f32 %v82, %v494
    %v528 = vmul.f32 %v83, %v494
    %v529 = vmul.f32 %v84, %v498
    %v530 = vmul.f32 %v85, %v498
    %531 = vst [vmem:[#allocation8] sm:$0xff] %v499
    %532 = vst [vmem:[#allocation8 + $0x8] sm:$0xff] %v500
    %533 = vst [vmem:[#allocation8 + $0x10] sm:$0xff] %v501
    %534 = vst [vmem:[#allocation8 + $0x18] sm:$0xff] %v502
    %535 = vst [vmem:[#allocation8 + $0x20] sm:$0xff] %v503
    %536 = vst [vmem:[#allocation8 + $0x28] sm:$0xff] %v504
    %537 = vst [vmem:[#allocation8 + $0x30] sm:$0xff] %v505
    %538 = vst [vmem:[#allocation8 + $0x38] sm:$0xff] %v506
    %539 = vst [vmem:[#allocation8 + $0x40] sm:$0xff] %v507
    %540 = vst [vmem:[#allocation8 + $0x48] sm:$0xff] %v508
    %541 = vst [vmem:[#allocation8 + $0x50] sm:$0xff] %v509
    %542 = vst [vmem:[#allocation8 + $0x58] sm:$0xff] %v510
    %543 = vst [vmem:[#allocation8 + $0x60] sm:$0xff] %v511
    %544 = vst [vmem:[#allocation8 + $0x68] sm:$0xff] %v512
    %545 = vst [vmem:[#allocation8 + $0x70] sm:$0xff] %v513
    %546 = vst [vmem:[#allocation8 + $0x78] sm:$0xff] %v514
    %547 = vst [vmem:[#allocation8 + $0x80] sm:$0xff] %v515
    %548 = vst [vmem:[#allocation8 + $0x88] sm:$0xff] %v516
    %549 = vst [vmem:[#allocation8 + $0x90] sm:$0xff] %v517
    %550 = vst [vmem:[#allocation8 + $0x98] sm:$0xff] %v518
    %551 = vst [vmem:[#allocation8 + $0xa0] sm:$0xff] %v519
    %552 = vst [vmem:[#allocation8 + $0xa8] sm:$0xff] %v520
    %553 = vst [vmem:[#allocation8 + $0xb0] sm:$0xff] %v521
    %554 = vst [vmem:[#allocation8 + $0xb8] sm:$0xff] %v522
    %555 = vst [vmem:[#allocation8 + $0xc0] sm:$0xff] %v523
    %556 = vst [vmem:[#allocation8 + $0xc8] sm:$0xff] %v524
    %557 = vst [vmem:[#allocation8 + $0xd0] sm:$0xff] %v525
    %558 = vst [vmem:[#allocation8 + $0xd8] sm:$0xff] %v526
    %559 = vst [vmem:[#allocation8 + $0xe0] sm:$0xff] %v527
    %560 = vst [vmem:[#allocation8 + $0xe8] sm:$0xff] %v528
    %561 = vst [vmem:[#allocation8 + $0xf0] sm:$0xff] %v529
    %562 = vst [vmem:[#allocation8 + $0xf8] sm:$0xff] %v530
    // Predicated region
    $region26: #{tpu_custom_call.1} parent=1 // pred_check
      _
    $region27: #{tpu_custom_call.1} parent=1 // pred_check_branch
      %564 = sbr.rel (0) target = $region29
    $region28: #{tpu_custom_call.1} parent=1 // pred_region
      %s566 = ssub.s32 4096, 4096
      %567 = vsyncadd [#allocation4], %s566
      %s568 = sshll.u32 [#allocation8], 4
      %s569 = int_to_ptr.vmem [resolvable:$true] %s568
      %574 = dma.vmem_to_hbm [thread:$0]  %s569, 4096, %s3, [#allocation4], 256, 256, 16
    $region29: #{tpu_custom_call.1} parent=1 // pred_fallthru
      _
    // Predicated region
    $region30: #{tpu_custom_call.1} parent=1 // pred_check
      _
    $region31: #{tpu_custom_call.1} parent=1 // pred_check_branch
      %576 = sbr.rel (0) target = $region33
    $region32: #{tpu_custom_call.1} parent=1 // pred_region
      %577 = dma.done [#allocation4], 4096
    $region33: #{tpu_custom_call.1} parent=1 // pred_fallthru
      _
    %578 = vsyncpa [#allocation3], 1
    %579 = vsyncpa [#allocation6], 1
    %580 = vsyncpa [#allocation4], 1

</llo_original>
